<compile_context>
chip_gen: v7x
topology: tpu7x:2x2x1
jax: 0.10.0
libtpu: 0.0.40
codegen_flags: <defaults>
</compile_context>

<pallas_src>
import functools

import jax
import jax.numpy as jnp
from jax.experimental import pallas as pl
from jax.experimental.pallas import tpu as pltpu


# --------------------------------------------------------------------------- #
# helpers
# --------------------------------------------------------------------------- #
def _round_up(x, m):
    return (x + m - 1) // m * m


def _pick_tile(dim, want, align):
    """Largest tile <= `want` that is a multiple of `align` and divides `dim`.
    Falls back to the full dim (full-extent blocks are always legal)."""
    if dim <= want:
        return dim
    t = (want // align) * align
    while t >= align:
        if dim % t == 0:
            return t
        t -= align
    return dim


def _vmem_budget_bytes():
    """~75% of physical VMEM (≈96 MiB on v5e/v6e's 128 MiB, ≈48 MiB on v7x's
    64 MiB); falls back to a v7x-safe value if the query is unavailable."""
    try:
        cap = int(pltpu.get_tpu_info().vmem_capacity_bytes)
    except Exception:
        cap = 64 << 20
    return max(cap * 3 // 4, 32 << 20)


def _estimate_vmem(tm, tk, tn, x_bytes, w_bytes, out_bytes, k_blocks):
    est = (2 * tm * tk * x_bytes            # double-buffered x tile
           + 2 * tk * 2 * tn * w_bytes      # double-buffered fused weight tile
           + 2 * 2 * tn * 4                 # bias tile (f32)
           + 2 * tm * tn * out_bytes)       # double-buffered output tile
    if k_blocks > 1:
        est += tm * 2 * tn * 4              # resident f32 accumulator scratch
    return est


# --------------------------------------------------------------------------- #
# kernels
# --------------------------------------------------------------------------- #
def _swishglu_epilogue(y, b_ref, o_ref, approx):
    # y: (tm, 2*tn) f32 matmul result; b_ref: (1, 2*tn) f32; o_ref: (tm, tn).
    tn = o_ref.shape[-1]
    y = y + b_ref[...]
    p = y[:, :tn]
    g = y[:, tn:]
    if approx:
        # exp and the approx reciprocal both go to the EUP slot -> frees VALU.
        sig = pl.reciprocal(1.0 + jnp.exp(-g), approx=True)
    else:
        sig = jax.nn.sigmoid(g)
    o_ref[...] = (p * (g * sig)).astype(o_ref.dtype)


def _swishglu_kernel_noacc(x_ref, w_ref, b_ref, o_ref, *, approx):
    # Single K block (2-D grid): no accumulator, no pl.when phases.
    y = jnp.dot(x_ref[...], w_ref[...], preferred_element_type=jnp.float32)
    _swishglu_epilogue(y, b_ref, o_ref, approx)


def _swishglu_kernel_acc(x_ref, w_ref, b_ref, o_ref, acc_ref, *, approx):
    # Tiled K (3-D grid, K innermost "arbitrary"): f32 accumulator resident
    # across the K axis, epilogue on the last K step.
    k = pl.program_id(2)

    @pl.when(k == 0)
    def _():
        acc_ref[...] = jnp.zeros_like(acc_ref)

    acc_ref[...] += jnp.dot(x_ref[...], w_ref[...],
                            preferred_element_type=jnp.float32)

    @pl.when(k == pl.num_programs(2) - 1)
    def _():
        _swishglu_epilogue(acc_ref[...], b_ref, o_ref, approx)


# --------------------------------------------------------------------------- #
# parameter preparation (call ONCE per weight, outside the hot path)
# --------------------------------------------------------------------------- #
def prepare_swishglu_params(weight, bias, *, tn=1024, compute_dtype=jnp.bfloat16):
    """weight: (2*out_dim, in_dim) [nn.Linear layout]; bias: (2*out_dim,).

    Returns a dict with:
      w_cat: (in_dim, 2*out_dim) laid out as [Wp_0 | Wg_0 | Wp_1 | Wg_1 | ...]
             in tiles of width tn_eff (one BlockSpec block = fused proj+gate
             tile -> a single MXU matmul per grid step),
      b_cat: (1, 2*out_dim) interleaved the same way, kept in f32,
      plus tiling metadata.
    """
    two_out, in_dim = weight.shape
    out_dim = two_out // 2
    assert two_out == 2 * out_dim, "weight must have shape (2*out_dim, in_dim)"
    tn_eff = _pick_tile(out_dim, tn, 128)
    nj = out_dim // tn_eff

    w_p = weight[:out_dim, :].T                 # (in_dim, out_dim)
    w_g = weight[out_dim:, :].T                 # (in_dim, out_dim)
    w_cat = jnp.stack(
        [w_p.reshape(in_dim, nj, tn_eff), w_g.reshape(in_dim, nj, tn_eff)],
        axis=2,
    ).reshape(in_dim, 2 * out_dim)
    if compute_dtype is not None:
        w_cat = w_cat.astype(compute_dtype)     # bf16 by default (MXU operands)

    b_cat = jnp.stack(
        [bias[:out_dim].reshape(nj, tn_eff), bias[out_dim:].reshape(nj, tn_eff)],
        axis=1,
    ).reshape(1, 2 * out_dim).astype(jnp.float32)

    return dict(w_cat=w_cat, b_cat=b_cat, in_dim=in_dim, out_dim=out_dim, tn=tn_eff)


# --------------------------------------------------------------------------- #
# pallas_call wrapper
# --------------------------------------------------------------------------- #
def swishglu_apply(x, params, *, tm=None, tk=2048, compute_dtype=None,
                   out_dtype=None, allow_k_collapse=True, approx_sigmoid=True):
    in_dim, out_dim, tn = params["in_dim"], params["out_dim"], params["tn"]
    w_cat, b_cat = params["w_cat"], params["b_cat"]
    assert x.shape[-1] == in_dim
    out_dtype = out_dtype or x.dtype
    cdtype = jnp.dtype(compute_dtype) if compute_dtype is not None else w_cat.dtype

    budget = _vmem_budget_bytes()
    if tm is None:
        # Big-VMEM chips (v5e/v6e) get tm=1024 (v6e HBM/MXU crossover ~680 rows);
        # v7x (64 MiB VMEM, 3.2 TB/s HBM) is compute-bound already at ~310.
        tm = 1024 if budget >= (90 << 20) else 512

    x_bytes = cdtype.itemsize
    w_bytes = w_cat.dtype.itemsize
    o_bytes = jnp.dtype(out_dtype).itemsize

    lead = x.shape[:-1]
    M = 1
    for d in lead:
        M *= d

    # Sublane packing: 8 rows for 4-byte dtypes, 16 for bf16, 32 for 1-byte.
    sub_align = 8 * max(1, 4 // x_bytes)
    tm_eff = min(tm, _round_up(M, sub_align))

    # K tiling: collapse to a single block whenever the full-K tiles fit the
    # VMEM budget (drops the accumulator + pl.when phases), else tile by tk.
    tk_eff = in_dim if in_dim <= tk else _pick_tile(in_dim, tk, 128)
    if allow_k_collapse and tk_eff != in_dim:
        full_k_est = _estimate_vmem(tm_eff, in_dim, tn, x_bytes, w_bytes, o_bytes, 1)
        if full_k_est * 3 // 2 <= budget:
            tk_eff = in_dim

    # Shrink the token tile if the footprint blows the budget (e.g. an awkward
    # in_dim with no 128-multiple divisor forcing a full-K block).
    def _over(tm_):
        kb = in_dim // tk_eff
        return _estimate_vmem(tm_, tk_eff, tn, x_bytes, w_bytes, o_bytes, kb) * 3 // 2 > budget
    while _over(tm_eff) and tm_eff > sub_align:
        tm_eff = max(sub_align, _round_up(tm_eff // 2, sub_align))
    if _over(tm_eff):
        raise ValueError(
            "SwishGLU tile footprint exceeds the VMEM budget; reduce tn "
            "(prepare_swishglu_params) or tk.")

    k_blocks = in_dim // tk_eff

    # Cast / pad x only when actually needed (single fused pass over x).
    x2 = x.reshape(M, in_dim)
    Mp = _round_up(M, tm_eff)
    if x2.dtype != cdtype:
        x2 = x2.astype(cdtype)
    if Mp != M:
        x2 = jnp.pad(x2, ((0, Mp - M), (0, 0)))

    est = _estimate_vmem(tm_eff, tk_eff, tn, x_bytes, w_bytes, o_bytes, k_blocks)
    vmem_limit = int(min(max(est * 3 // 2, 32 << 20), budget))

    # NOTE(v7x megacore): best throughput when (Mp//tm_eff)*(out_dim//tn) is a
    # multiple of 2 so both TensorCores get work; for degenerate tiny shapes a
    # single parallel block is accepted.
    if k_blocks == 1:
        grid = (Mp // tm_eff, out_dim // tn)
        kernel = functools.partial(_swishglu_kernel_noacc, approx=approx_sigmoid)
        in_specs = [
            pl.BlockSpec((tm_eff, in_dim), lambda i, j: (i, 0)),
            pl.BlockSpec((in_dim, 2 * tn), lambda i, j: (0, j)),
            pl.BlockSpec((1, 2 * tn), lambda i, j: (0, j)),
        ]
        out_specs = pl.BlockSpec((tm_eff, tn), lambda i, j: (i, j))
        scratch = []
        dims = ("parallel", "parallel")
    else:
        grid = (Mp // tm_eff, out_dim // tn, k_blocks)
        kernel = functools.partial(_swishglu_kernel_acc, approx=approx_sigmoid)
        in_specs = [
            pl.BlockSpec((tm_eff, tk_eff), lambda i, j, k: (i, k)),
            pl.BlockSpec((tk_eff, 2 * tn), lambda i, j, k: (k, j)),
            pl.BlockSpec((1, 2 * tn), lambda i, j, k: (0, j)),
        ]
        out_specs = pl.BlockSpec((tm_eff, tn), lambda i, j, k: (i, j))
        scratch = [pltpu.VMEM((tm_eff, 2 * tn), jnp.float32)]
        dims = ("parallel", "parallel", "arbitrary")

    out = pl.pallas_call(
        kernel,
        out_shape=jax.ShapeDtypeStruct((Mp, out_dim), out_dtype),
        grid_spec=pltpu.PrefetchScalarGridSpec(
            num_scalar_prefetch=0,
            grid=grid,
            in_specs=in_specs,
            out_specs=out_specs,
            scratch_shapes=scratch,
        ),
        compiler_params=pltpu.CompilerParams(
            dimension_semantics=dims,
            vmem_limit_bytes=vmem_limit,
        ),
    )(x2, w_cat, b_cat)

    if Mp != M:
        out = out[:M]
    return out.reshape(*lead, out_dim)


def swishglu(x, weight, bias, *, tm=None, tn=1024, tk=2048,
             compute_dtype=jnp.bfloat16, approx_sigmoid=True,
             allow_k_collapse=True):
    """Convenience one-shot wrapper. For repeated calls, hoist
    prepare_swishglu_params() out of the hot path and call swishglu_apply()."""
    params = prepare_swishglu_params(weight, bias, tn=tn, compute_dtype=compute_dtype)
    return swishglu_apply(x, params, tm=tm, tk=tk, out_dtype=x.dtype,
                          allow_k_collapse=allow_k_collapse,
                          approx_sigmoid=approx_sigmoid)


# --------------------------------------------------------------------------- #
# pure-JAX reference (mirrors the PyTorch module)
# --------------------------------------------------------------------------- #
def swishglu_ref(x, weight, bias):
    y = jnp.einsum("...i,oi->...o", x, weight) + bias
    out_dim = weight.shape[0] // 2
    projected, gate = y[..., :out_dim], y[..., out_dim:]
    return projected * (gate * jax.nn.sigmoid(gate))


# --------------------------------------------------------------------------- #
if __name__ == "__main__":
    key = jax.random.PRNGKey(0)
    k_x, k_w, k_b, k_x2, k_w2, k_b2 = jax.random.split(key, 6)

    # --- small test (module-sized shapes): exact f32 path ---------------- #
    batch, seq, in_dim, out_dim = 2, 8, 32, 32
    x = jax.random.normal(k_x, (batch, seq, in_dim), dtype=jnp.float32)
    weight = jax.random.normal(k_w, (2 * out_dim, in_dim), dtype=jnp.float32) * 0.05
    bias = jax.random.normal(k_b, (2 * out_dim,), dtype=jnp.float32) * 0.05
    ref = swishglu_ref(x, weight, bias)

    out_f32 = jax.block_until_ready(
        swishglu(x, weight, bias, compute_dtype=jnp.float32, approx_sigmoid=False))
    assert out_f32.shape == (batch, seq, out_dim)
    assert jnp.allclose(out_f32, ref, atol=1e-5, rtol=1e-5), "f32 mismatch vs reference"

    # Default fast path: bf16 MXU operands + EUP approx reciprocal in SiLU,
    # f32 accumulation/epilogue.
    out_fast = jax.block_until_ready(swishglu(x, weight, bias))
    assert out_fast.shape == (batch, seq, out_dim)
    assert jnp.allclose(out_fast, ref, atol=5e-2, rtol=5e-2), "bf16 mismatch vs reference"

    # --- tiled / padded test: M padding, N tiling, K-axis accumulator ---- #
    b2, s2, in2, od2 = 2, 37, 256, 256          # M = 74 (not a tile multiple)
    x_big = jax.random.normal(k_x2, (b2, s2, in2), dtype=jnp.float32)
    w_big = jax.random.normal(k_w2, (2 * od2, in2), dtype=jnp.float32) * 0.05
    b_big = jax.random.normal(k_b2, (2 * od2,), dtype=jnp.float32) * 0.05
    ref_big = swishglu_ref(x_big, w_big, b_big)

    out_big = jax.block_until_ready(
        swishglu(x_big, w_big, b_big, tm=64, tn=128, tk=128,
                 compute_dtype=jnp.float32, approx_sigmoid=False,
                 allow_k_collapse=False))
    assert out_big.shape == (b2, s2, od2)
    assert jnp.allclose(out_big, ref_big, atol=1e-4, rtol=1e-4), "tiled f32 mismatch"

    out_big_fast = jax.block_until_ready(
        swishglu(x_big, w_big, b_big, tm=64, tn=128, tk=128,
                 allow_k_collapse=False))
    assert jnp.allclose(out_big_fast, ref_big, atol=5e-2, rtol=5e-2), "tiled bf16 mismatch"

    print("KERNEL_OK")
</pallas_src>

<mosaic_0001>
module attributes {stable_mosaic.version = 11 : i64} {
  func.func @_swishglu_kernel_noacc(%arg0: i32, %arg1: i32, %arg2: memref<16x32xf32, #tpu.memory_space<vmem>>, %arg3: memref<32x64xf32, #tpu.memory_space<vmem>>, %arg4: memref<1x64xf32, #tpu.memory_space<vmem>>, %arg5: memref<16x32xf32, #tpu.memory_space<vmem>>) attributes {dimension_semantics = [#tpu.dimension_semantics<parallel>, #tpu.dimension_semantics<parallel>], iteration_bounds = array<i64: 1, 1>, scalar_prefetch = 0 : i64, scratch_operands = 0 : i64, tpu.core_type = #tpu.core_type<tc>, window_params = [{transform_indices = @transform_0, window_bounds = array<i64: 16, 32>}, {transform_indices = @transform_1, window_bounds = array<i64: 32, 64>}, {transform_indices = @transform_2, window_bounds = array<i64: 1, 64>}, {transform_indices = @transform_3, window_bounds = array<i64: 16, 32>}]} {
    %c0 = arith.constant 0 : index
    %c0_0 = arith.constant 0 : index
    %0 = vector.load %arg2[%c0, %c0_0] : memref<16x32xf32, #tpu.memory_space<vmem>>, vector<16x32xf32>
    %c0_1 = arith.constant 0 : index
    %c0_2 = arith.constant 0 : index
    %1 = vector.load %arg3[%c0_1, %c0_2] : memref<32x64xf32, #tpu.memory_space<vmem>>, vector<32x64xf32>
    %cst = arith.constant dense<0.000000e+00> : vector<16x64xf32>
    %2 = tpu.matmul %0, %1, %cst {dimension_numbers = #tpu.dot_dimension_numbers<[1], [0], [0], [1], [0, 0, 1, 1], [], []>} : vector<16x32xf32>, vector<32x64xf32>, vector<16x64xf32> -> vector<16x64xf32>
    %c0_3 = arith.constant 0 : index
    %c0_4 = arith.constant 0 : index
    %3 = vector.load %arg4[%c0_3, %c0_4] : memref<1x64xf32, #tpu.memory_space<vmem>>, vector<1x64xf32>
    %4 = vector.broadcast %3 : vector<1x64xf32> to vector<16x64xf32>
    %5 = arith.addf %2, %4 : vector<16x64xf32>
    %6 = vector.extract_strided_slice %5 {offsets = [0, 0], sizes = [16, 32], strides = [1, 1]} : vector<16x64xf32> to vector<16x32xf32>
    %7 = vector.extract_strided_slice %5 {offsets = [0, 32], sizes = [16, 32], strides = [1, 1]} : vector<16x64xf32> to vector<16x32xf32>
    %8 = arith.negf %7 : vector<16x32xf32>
    %9 = math.exp %8 : vector<16x32xf32>
    %cst_5 = arith.constant 1.000000e+00 : f32
    %10 = vector.broadcast %cst_5 : f32 to vector<16x32xf32>
    %11 = arith.addf %10, %9 : vector<16x32xf32>
    %12 = arith.divf %10, %11 : vector<16x32xf32>
    %13 = arith.mulf %7, %12 : vector<16x32xf32>
    %14 = arith.mulf %6, %13 : vector<16x32xf32>
    %c0_6 = arith.constant 0 : index
    %c0_7 = arith.constant 0 : index
    %15 = vector.load %arg5[%c0_6, %c0_7] : memref<16x32xf32, #tpu.memory_space<vmem>>, vector<16x32xf32>
    tpu.vector_store %arg5[%c0_6, %c0_7], %14 {strides = array<i32>} : memref<16x32xf32, #tpu.memory_space<vmem>>, vector<16x32xf32>,
    return
  }
  func.func @transform_0(%arg0: i32, %arg1: i32) -> (i32, i32) {
    %c0_i32 = arith.constant 0 : i32
    %c0_i32_0 = arith.constant 0 : i32
    return %arg0, %c0_i32 : i32, i32
  }
  func.func @transform_1(%arg0: i32, %arg1: i32) -> (i32, i32) {
    %c0_i32 = arith.constant 0 : i32
    %c0_i32_0 = arith.constant 0 : i32
    return %c0_i32, %arg1 : i32, i32
  }
  func.func @transform_2(%arg0: i32, %arg1: i32) -> (i32, i32) {
    %c0_i32 = arith.constant 0 : i32
    %c0_i32_0 = arith.constant 0 : i32
    return %c0_i32, %arg1 : i32, i32
  }
  func.func @transform_3(%arg0: i32, %arg1: i32) -> (i32, i32) {
    %c0_i32 = arith.constant 0 : i32
    return %arg0, %arg1 : i32, i32
  }
}

</mosaic_0001>

<llo_original>
// kernel: tpu_custom_call.1
$region0: #{tpu_custom_call.1}
  #allocation0 [shape = 'u32[]', space=smem, size = 0x4, offset = 0x4, fixed_abs, tag = 'smem constant byte address 0x4 - core index']
  #allocation1 [shape = 'u32[144,128]{1,0:T(1,128)}', space=vmem, size = 0x12000, scoped, tag = 'internal scratch']
  %s0 = inlined_call_operand.hbm [shape: f32[16,32], index: 0, kind: input, shape index: {}]
  %s1 = inlined_call_operand.hbm [shape: f32[32,64], index: 1, kind: input, shape index: {}]
  %s2 = inlined_call_operand.vmem [shape: f32[1,64], index: 2, kind: input, shape index: {}]
  %s3 = inlined_call_operand.hbm [shape: f32[16,32], index: 3, kind: output, shape index: {}]
  %s4 = sld [smem:[#allocation0]]
  $region30: #{tpu_custom_call.1} parent=0
    _
  %s6 = ssub.s32 1, %s4
  %s7 = scalar_select 0, %s6, %s4
  $region1: #{tpu_custom_call.1} parent=0
    #allocation2 [shape = 'u8[8192]{0}', space=vmem, size = 0x2000, scoped, tag = 'input window, operand 0, single buffered']
    #allocation3 [shape = 's32[1]{0}', space=sflag, size = 0x4, scoped, tag = 'scoped memory for tpu_custom_call.1']
    #allocation4 [shape = 's32[1]{0}', space=sflag, size = 0x4, scoped, tag = 'scoped memory for tpu_custom_call.1']
    #allocation5 [shape = 'u8[16384]{0}', space=vmem, size = 0x4000, scoped, tag = 'input window, operand 1, single buffered']
    #allocation6 [shape = 's32[1]{0}', space=sflag, size = 0x4, scoped, tag = 'scoped memory for tpu_custom_call.1']
    #allocation7 [shape = 'u8[8192]{0}', space=vmem, size = 0x2000, scoped, tag = 'output window, operand 0, single buffered']
    %8 = vsyncpa [#allocation3], 0
    %9 = vsyncpa [#allocation6], 0
    %10 = vsyncpa [#allocation4], 0
    // Predicated region
    $region2: #{tpu_custom_call.1} parent=1 // pred_check
      _
    $region3: #{tpu_custom_call.1} parent=1 // pred_check_branch
      %12 = sbr.rel (0) target = $region5
    $region4: #{tpu_custom_call.1} parent=1 // pred_region
      %s14 = ssub.s32 256, 256
      %15 = vsyncadd [#allocation3], %s14
      %s16 = sshll.u32 [#allocation2], 4
      %s17 = int_to_ptr.vmem [resolvable:$true] %s16
      %22 = dma.hbm_to_vmem [thread:$0]  %s0, 256, %s17, [#allocation3], 128, 128, 8
    $region5: #{tpu_custom_call.1} parent=1 // pred_fallthru
      _
    // Predicated region
    $region6: #{tpu_custom_call.1} parent=1 // pred_check
      _
    $region7: #{tpu_custom_call.1} parent=1 // pred_check_branch
      %24 = sbr.rel (0) target = $region9
    $region8: #{tpu_custom_call.1} parent=1 // pred_region
      %s26 = ssub.s32 512, 512
      %27 = vsyncadd [#allocation6], %s26
      %s28 = sshll.u32 [#allocation5], 4
      %s29 = int_to_ptr.vmem [resolvable:$true] %s28
      %34 = dma.hbm_to_vmem [thread:$0]  %s1, 512, %s29, [#allocation6], 128, 128, 8
    $region9: #{tpu_custom_call.1} parent=1 // pred_fallthru
      _
    // Predicated region
    $region10: #{tpu_custom_call.1} parent=1 // pred_check
      _
    $region11: #{tpu_custom_call.1} parent=1 // pred_check_branch
      %36 = sbr.rel (0) target = $region13
    $region12: #{tpu_custom_call.1} parent=1 // pred_region
      _
    $region13: #{tpu_custom_call.1} parent=1 // pred_fallthru
      _
    // Predicated region
    $region14: #{tpu_custom_call.1} parent=1 // pred_check
      _
    $region15: #{tpu_custom_call.1} parent=1 // pred_check_branch
      %38 = sbr.rel (0) target = $region17
    $region16: #{tpu_custom_call.1} parent=1 // pred_region
      %39 = dma.done [#allocation3], 256
    $region17: #{tpu_custom_call.1} parent=1 // pred_fallthru
      _
    // Predicated region
    $region18: #{tpu_custom_call.1} parent=1 // pred_check
      _
    $region19: #{tpu_custom_call.1} parent=1 // pred_check_branch
      %41 = sbr.rel (0) target = $region21
    $region20: #{tpu_custom_call.1} parent=1 // pred_region
      %42 = dma.done [#allocation6], 512
    $region21: #{tpu_custom_call.1} parent=1 // pred_fallthru
      _
    %v43 = vld [vmem:[#allocation2] sm:$0xff]
    %v44 = vld [vmem:[#allocation2 + $0x8] sm:$0xff]
    %v45 = vld [vmem:[#allocation5] sm:$0xff]
    %v46 = vld [vmem:[#allocation5 + $0x8] sm:$0xff]
    %v47 = vld [vmem:[#allocation5 + $0x10] sm:$0xff]
    %v48 = vld [vmem:[#allocation5 + $0x18] sm:$0xff]
    %v49 = vld [vmem:[%s2] sm:$0x1]
    %v51 = vlaneseq
    %v52 = vshrl.u32 %v51, 7
    %v53 = vsub.s32 0, %v52
    %v54 = vrot.slane %v49, %v53
    %vm56 = vcmask 261120
    %v58 = vsel %vm56, %v43, 0
    %v61 = vsel %vm56, %v44, 0
    %63 = vmatprep.subr.mxu0 0.0
    %64 = vmatpush1.msra.mxu0 %v45
    %65 = vmatprep.subr.mxu0 0.0
    %66 = vmatpush1.msra.mxu0 %v46
    %67 = vmatprep.subr.mxu0 0.0
    %68 = vmatpush1.msra.mxu0 %v47
    %69 = vmatprep.subr.mxu0 0.0
    %70 = vmatpush1.msra.mxu0 %v48
    %71 = vmatprep.subr.mxu0 0.0
    %72 = vmatpush1.msra.mxu0 0.0
    %73 = vmatprep.subr.mxu0 0.0
    %74 = vmatpush1.msra.mxu0 0.0
    %75 = vmatprep.subr.mxu0 0.0
    %76 = vmatpush1.msra.mxu0 0.0
    %77 = vmatprep.subr.mxu0 0.0
    %78 = vmatpush1.msra.mxu0 0.0
    %79 = vmatprep.subr.mxu0 0.0
    %80 = vmatpush1.msra.mxu0 0.0
    %81 = vmatprep.subr.mxu0 0.0
    %82 = vmatpush1.msra.mxu0 0.0
    %83 = vmatprep.subr.mxu0 0.0
    %84 = vmatpush1.msra.mxu0 0.0
    %85 = vmatprep.subr.mxu0 0.0
    %86 = vmatpush1.msra.mxu0 0.0
    %87 = vmatprep.subr.mxu0 0.0
    %88 = vmatpush1.msra.mxu0 0.0
    %89 = vmatprep.subr.mxu0 0.0
    %90 = vmatpush1.msra.mxu0 0.0
    %91 = vmatprep.subr.mxu0 0.0
    %92 = vmatpush1.msra.mxu0 0.0
    %93 = vmatprep.subr.mxu0 0.0
    %94 = vmatpush1.msra.mxu0 0.0
    %95 = vmatprep.subr.mxu0 0.0
    %96 = vmatpush1.msra.mxu0 0.0
    %97 = vmatprep.subr.mxu0 0.0
    %98 = vmatpush1.msra.mxu0 0.0
    %99 = vmatprep.subr.mxu0 0.0
    %100 = vmatpush1.msra.mxu0 0.0
    %101 = vmatprep.subr.mxu0 0.0
    %102 = vmatpush1.msra.mxu0 0.0
    %103 = vmatprep.subr.mxu0 0.0
    %104 = vmatpush1.msra.mxu0 0.0
    %105 = vmatprep.subr.mxu0 0.0
    %106 = vmatpush1.msra.mxu0 0.0
    %107 = vmatprep.subr.mxu0 0.0
    %108 = vmatpush1.msra.mxu0 0.0
    %109 = vmatprep.subr.mxu0 0.0
    %110 = vmatpush1.msra.mxu0 0.0
    %111 = vmatprep.subr.mxu0 0.0
    %112 = vmatpush1.msra.mxu0 0.0
    %113 = vmatprep.subr.mxu0 0.0
    %114 = vmatpush1.msra.mxu0 0.0
    %115 = vmatprep.subr.mxu0 0.0
    %116 = vmatpush1.msra.mxu0 0.0
    %117 = vmatprep.subr.mxu0 0.0
    %118 = vmatpush1.msra.mxu0 0.0
    %119 = vmatprep.subr.mxu0 0.0
    %120 = vmatpush1.msra.mxu0 0.0
    %121 = vmatprep.subr.mxu0 0.0
    %122 = vmatpush1.msra.mxu0 0.0
    %123 = vmatprep.subr.mxu0 0.0
    %124 = vmatpush1.msra.mxu0 0.0
    %125 = vmatprep.subr.mxu0 0.0
    %126 = vmatpush1.msra.mxu0 0.0
    %127 = vmatprep.mubr.f32.mxu0 0.0
    %128 = vmatmul.mubr.f32.gmra.mrb[0].mxu0 %v58
    %v129 = vpop.f32.mrb[0].mxu0
    %v130 = vadd.f32 %v54, %v129
    %v131 = vpop.f32.mrb[0].mxu0
    %132 = vmatprep.mubr.f32.mxu0 0.0
    %133 = vmatmul.mubr.f32.gmra.mrb[0].mxu0 %v61
    %v134 = vpop.f32.mrb[0].mxu0
    %v135 = vadd.f32 %v54, %v134
    %v136 = vpop.f32.mrb[0].mxu0
    %137 = vdwg.mxu0
    %v138 = vxor.u32 %v130, 2147483648
    %v139 = vxor.u32 %v135, 2147483648
    %v140 = vmul.f32 %v138, 1.442695
    %v141 = vpow.pop %v140
    %v142 = vmul.f32 %v139, 1.442695
    %v143 = vpow.pop %v142
    %v144 = vadd.f32 %v141, 1.0
    %v145 = vadd.f32 %v143, 1.0
    %v146 = vrcp.pop %v144
    %v147 = vmul.f32 1.0, %v146
    %v148 = vrcp.pop %v145
    %v149 = vmul.f32 1.0, %v148
    %v150 = vmul.f32 %v130, %v147
    %v151 = vmul.f32 %v135, %v149
    %154 = vrot.lane.b32.xlu0 %v150, 96
    %v155 = vpop.permute.xlu0 %154
    %156 = vrot.lane.b32.xlu0 %v151, 96
    %v157 = vpop.permute.xlu0 %156
    %v160 = vmul.f32 %v130, %v155
    %v161 = vmul.f32 %v135, %v157
    %162 = vst.msk [vmem:[#allocation7] sm:$0xff] %vm56, %v160
    %163 = vst.msk [vmem:[#allocation7 + $0x8] sm:$0xff] %vm56, %v161
    // Predicated region
    $region22: #{tpu_custom_call.1} parent=1 // pred_check
      _
    $region23: #{tpu_custom_call.1} parent=1 // pred_check_branch
      %165 = sbr.rel (0) target = $region25
    $region24: #{tpu_custom_call.1} parent=1 // pred_region
      %s167 = ssub.s32 256, 256
      %168 = vsyncadd [#allocation4], %s167
      %s169 = sshll.u32 [#allocation7], 4
      %s170 = int_to_ptr.vmem [resolvable:$true] %s169
      %175 = dma.vmem_to_hbm [thread:$0]  %s170, 256, %s3, [#allocation4], 128, 128, 8
    $region25: #{tpu_custom_call.1} parent=1 // pred_fallthru
      _
    // Predicated region
    $region26: #{tpu_custom_call.1} parent=1 // pred_check
      _
    $region27: #{tpu_custom_call.1} parent=1 // pred_check_branch
      %177 = sbr.rel (0) target = $region29
    $region28: #{tpu_custom_call.1} parent=1 // pred_region
      %178 = dma.done [#allocation4], 256
    $region29: #{tpu_custom_call.1} parent=1 // pred_fallthru
      _
    %179 = vsyncpa [#allocation3], 1
    %180 = vsyncpa [#allocation6], 1
    %181 = vsyncpa [#allocation4], 1

</llo_original>
